<compile_context>
chip_gen: v5e
topology: v5e:2x2
jax: 0.10.0
libtpu: 0.0.40
codegen_flags: <defaults>
</compile_context>

<pallas_src>
import math

import jax
import jax.numpy as jnp
from jax.experimental import pallas as pl
from jax.experimental.pallas import tpu as pltpu


# ---------------------------------------------------------------------------
# Helpers
# ---------------------------------------------------------------------------
def _round_up(x, m):
    return ((x + m - 1) // m) * m


def _vmem_capacity_bytes():
    """Generation-aware VMEM capacity (64 MiB on v7x, 128 MiB on v5e/v6e)."""
    try:
        return int(pltpu.get_tpu_info().vmem_capacity_bytes)
    except Exception:
        return 128 << 20


def _resident_spec(block_shape, index_map):
    """BlockSpec for a VMEM-resident operand (constant index_map).

    Single-buffered to halve its VMEM footprint; falls back to the default
    double-buffered spec if pipeline_mode / Buffered(1) is unsupported.
    """
    try:
        return pl.BlockSpec(block_shape, index_map,
                            pipeline_mode=pl.Buffered(1))
    except Exception:
        return pl.BlockSpec(block_shape, index_map)


# ---------------------------------------------------------------------------
# Kernel
# ---------------------------------------------------------------------------
def _box_predictor_kernel(x_ref, w_ref, b_ref, out_ref):
    # Cast x on the VMEM tile (bf16 by default) -> MXU bf16 x bf16 -> f32 acc
    # -> + f32 bias -> cast to the output dtype.
    xv = x_ref[...].astype(w_ref.dtype)
    acc = jnp.dot(xv, w_ref[...], preferred_element_type=jnp.float32)
    out_ref[...] = (acc + b_ref[...]).astype(out_ref.dtype)


# ---------------------------------------------------------------------------
# Param prep (one-time, hoisted out of the per-call path)
# ---------------------------------------------------------------------------
def prepare_params(cls_w, cls_b, bbox_w, bbox_b, compute_dtype=jnp.bfloat16):
    """Fuse the two Linear layers into one lane-dense weight/bias.

    Layout: columns [0, nc)              -> cls head
            columns [nc_pad, nc_pad+nb)  -> bbox head (128-aligned offset)
    so both post-kernel column slices start lane-aligned.

    Args:
      cls_w:  (num_classes, C)       (PyTorch nn.Linear convention)
      cls_b:  (num_classes,)
      bbox_w: (num_classes*4, C)
      bbox_b: (num_classes*4,)
      compute_dtype: dtype of the matmul operands (bf16 default; f32 acc).

    Returns:
      (w_pad (C, OUT_pad), b_pad (1, OUT_pad) f32, meta dict)
    """
    nc, c = cls_w.shape
    nb, c2 = bbox_w.shape
    assert c == c2, "cls_score and bbox_pred must share in_channels"

    nc_pad = _round_up(nc, 128)
    out_pad = _round_up(nc_pad + nb, 256)   # 256-aligned N for v6e/v7x MXU

    w = jnp.concatenate(
        [jnp.pad(cls_w.T, ((0, 0), (0, nc_pad - nc))),
         jnp.pad(bbox_w.T, ((0, 0), (0, out_pad - nc_pad - nb)))],
        axis=1)                                                  # (C, OUT_pad)
    if compute_dtype is not None:
        w = w.astype(compute_dtype)

    b = jnp.concatenate(
        [jnp.pad(cls_b.astype(jnp.float32), (0, nc_pad - nc)),
         jnp.pad(bbox_b.astype(jnp.float32), (0, out_pad - nc_pad - nb))],
    ).reshape(1, out_pad)                                        # (1, OUT_pad)

    meta = dict(nc=nc, nb=nb, c=c, nc_pad=nc_pad, out_pad=out_pad)
    return w, b, meta


# ---------------------------------------------------------------------------
# Tile sizing
# ---------------------------------------------------------------------------
def _choose_tm(c, out_pad, x_bytes, w_bytes, out_bytes, budget):
    """Largest row tile that fits the VMEM budget: resident W/bias are
    single-buffered, x/out tiles double-buffered.  Multiple of 256 when
    large (v6e/v7x MXU), multiple of 8 otherwise, capped at 512."""
    fixed = c * out_pad * w_bytes + out_pad * 4
    per_row = 2 * (c * x_bytes + out_pad * out_bytes)
    avail = max(budget - fixed, 8 * per_row)
    tm = min(512, avail // per_row)
    if tm >= 256:
        return int((tm // 256) * 256)
    return int(max(8, (tm // 8) * 8))


# ---------------------------------------------------------------------------
# Forward pass with pre-prepared params (hot path)
# ---------------------------------------------------------------------------
def box_predictor_prepared(x, w_pad, b_pad, meta, *, min_pallas_rows=128):
    if x.ndim == 4:
        assert x.shape[2] == 1 and x.shape[3] == 1, "expected [*, *, 1, 1]"
    x2d = x.reshape(x.shape[0], -1)          # flatten(start_dim=1)

    n, c = x2d.shape
    nc, nb = meta["nc"], meta["nb"]
    nc_pad, out_pad = meta["nc_pad"], meta["out_pad"]
    assert c == meta["c"]

    out_dtype = x2d.dtype

    # Small-N fast path: launch + per-step overhead dominates; let XLA fuse a
    # plain dot with surrounding ops instead of paying the pallas_call cost.
    if n <= min_pallas_rows:
        acc = (jnp.dot(x2d.astype(w_pad.dtype), w_pad,
                       preferred_element_type=jnp.float32)
               + b_pad).astype(out_dtype)
        return acc[:, :nc], acc[:, nc_pad:nc_pad + nb]

    x_bytes = jnp.dtype(x2d.dtype).itemsize
    w_bytes = jnp.dtype(w_pad.dtype).itemsize
    out_bytes = jnp.dtype(out_dtype).itemsize

    capacity = _vmem_capacity_bytes()
    budget = max(8 << 20, (capacity * 3) // 8)   # ~48 MiB v5e/v6e, ~24 MiB v7x

    tm = _choose_tm(c, out_pad, x_bytes, w_bytes, out_bytes, budget)
    if n <= tm:
        if n >= 512:
            # Guarantee >= 2 grid steps so both v7x TensorCores get a share.
            tm = _round_up(pl.cdiv(n, 2), 256)
        else:
            tm = _round_up(n, 8)
    grid = (pl.cdiv(n, tm),)

    # VMEM accounting: double-buffered x/out tiles + single-buffered residents.
    vmem_needed = (2 * tm * c * x_bytes
                   + c * out_pad * w_bytes
                   + out_pad * 4
                   + 2 * tm * out_pad * out_bytes)
    vmem_limit = int(min(budget, max(16 << 20, vmem_needed + (4 << 20))))

    cost = pl.CostEstimate(
        flops=int(2 * n * c * out_pad),
        transcendentals=0,
        bytes_accessed=int(n * c * x_bytes + c * out_pad * w_bytes
                           + out_pad * 4 + n * out_pad * out_bytes),
    )

    out = pl.pallas_call(
        _box_predictor_kernel,
        out_shape=jax.ShapeDtypeStruct((n, out_pad), out_dtype),
        grid=grid,
        in_specs=[
            pl.BlockSpec((tm, c), lambda i: (i, 0)),          # x row tile
            _resident_spec((c, out_pad), lambda i: (0, 0)),   # resident fused W
            _resident_spec((1, out_pad), lambda i: (0, 0)),   # resident bias
        ],
        out_specs=pl.BlockSpec((tm, out_pad), lambda i: (i, 0)),
        compiler_params=pltpu.CompilerParams(
            dimension_semantics=("parallel",),
            vmem_limit_bytes=vmem_limit,
        ),
        cost_estimate=cost,
    )(x2d, w_pad, b_pad)

    # Lane-aligned slices: cls head starts at column 0, bbox head at column
    # nc_pad (a multiple of 128).  Rows are exact (no padding to strip).
    scores = out[:, :nc]
    bbox_deltas = out[:, nc_pad:nc_pad + nb]
    return scores, bbox_deltas


# ---------------------------------------------------------------------------
# Convenience wrapper mirroring BoxPredictor.forward (preps params inline).
# Prefer prepare_params(...) once at model load + box_predictor_prepared(...).
# ---------------------------------------------------------------------------
def box_predictor(x, cls_w, cls_b, bbox_w, bbox_b,
                  compute_dtype=jnp.bfloat16, min_pallas_rows=128):
    w_pad, b_pad, meta = prepare_params(cls_w, cls_b, bbox_w, bbox_b,
                                        compute_dtype=compute_dtype)
    return box_predictor_prepared(x, w_pad, b_pad, meta,
                                  min_pallas_rows=min_pallas_rows)


# ---------------------------------------------------------------------------
# Init matching nn.Linear defaults (uniform +/- 1/sqrt(fan_in))
# ---------------------------------------------------------------------------
def init_params(key, in_channels, num_classes, dtype=jnp.float32):
    k1, k2, k3, k4 = jax.random.split(key, 4)
    bound = 1.0 / math.sqrt(in_channels)
    cls_w = jax.random.uniform(k1, (num_classes, in_channels), dtype,
                               minval=-bound, maxval=bound)
    cls_b = jax.random.uniform(k2, (num_classes,), dtype,
                               minval=-bound, maxval=bound)
    bbox_w = jax.random.uniform(k3, (num_classes * 4, in_channels), dtype,
                                minval=-bound, maxval=bound)
    bbox_b = jax.random.uniform(k4, (num_classes * 4,), dtype,
                                minval=-bound, maxval=bound)
    return cls_w, cls_b, bbox_w, bbox_b


if __name__ == "__main__":
    key = jax.random.PRNGKey(0)
    kx, kp = jax.random.split(key)

    batch = 16          # ROI count
    in_channels = 32
    num_classes = 8

    # Input as it arrives from the ROI head: (N, C, 1, 1)
    x = jax.random.normal(kx, (batch, in_channels, 1, 1), jnp.float32)

    cls_w, cls_b, bbox_w, bbox_b = init_params(kp, in_channels, num_classes)

    # One-time param prep (bf16 operands, f32 bias / accumulate).
    w_pad, b_pad, meta = prepare_params(cls_w, cls_b, bbox_w, bbox_b)

    # min_pallas_rows=0 forces the Pallas path so the kernel is exercised at
    # this small test size (production callers keep the small-N fast path).
    scores, bbox_deltas = box_predictor_prepared(x, w_pad, b_pad, meta,
                                                 min_pallas_rows=0)
    jax.block_until_ready((scores, bbox_deltas))

    # Reference check against plain f32 JAX. bf16 operands -> loosened
    # tolerance; accumulation stays f32 so error is bounded by operand
    # rounding (K=32 here).
    x2d = x.reshape(batch, -1)
    ref_scores = x2d @ cls_w.T + cls_b
    ref_bbox = x2d @ bbox_w.T + bbox_b
    assert scores.shape == (batch, num_classes)
    assert bbox_deltas.shape == (batch, num_classes * 4)
    assert jnp.allclose(scores, ref_scores, atol=3e-2, rtol=3e-2)
    assert jnp.allclose(bbox_deltas, ref_bbox, atol=3e-2, rtol=3e-2)

    print("KERNEL_OK")
</pallas_src>

<mosaic_0001>
module attributes {stable_mosaic.version = 11 : i64} {
  func.func @_box_predictor_kernel(%arg0: i32, %arg1: memref<16x32xf32, #tpu.memory_space<vmem>>, %arg2: memref<32x256xbf16, #tpu.memory_space<vmem>>, %arg3: memref<1x256xf32, #tpu.memory_space<vmem>>, %arg4: memref<16x256xf32, #tpu.memory_space<vmem>>) attributes {dimension_semantics = [#tpu.dimension_semantics<parallel>], iteration_bounds = array<i64: 1>, scalar_prefetch = 0 : i64, scratch_operands = 0 : i64, tpu.core_type = #tpu.core_type<tc>, window_params = [{transform_indices = @transform_0, window_bounds = array<i64: 16, 32>}, {pipeline_mode = #tpu.pipeline_mode<synchronous>, transform_indices = @transform_1, window_bounds = array<i64: 32, 256>}, {pipeline_mode = #tpu.pipeline_mode<synchronous>, transform_indices = @transform_2, window_bounds = array<i64: 1, 256>}, {transform_indices = @transform_3, window_bounds = array<i64: 16, 256>}]} {
    %c0 = arith.constant 0 : index
    %c0_0 = arith.constant 0 : index
    %0 = vector.load %arg1[%c0, %c0_0] : memref<16x32xf32, #tpu.memory_space<vmem>>, vector<16x32xf32>
    %1 = arith.truncf %0 : vector<16x32xf32> to vector<16x32xbf16>
    %c0_1 = arith.constant 0 : index
    %c0_2 = arith.constant 0 : index
    %2 = vector.load %arg2[%c0_1, %c0_2] : memref<32x256xbf16, #tpu.memory_space<vmem>>, vector<32x256xbf16>
    %cst = arith.constant dense<0.000000e+00> : vector<16x256xf32>
    %3 = tpu.matmul %1, %2, %cst {dimension_numbers = #tpu.dot_dimension_numbers<[1], [0], [0], [1], [0, 0, 1, 1], [], []>} : vector<16x32xbf16>, vector<32x256xbf16>, vector<16x256xf32> -> vector<16x256xf32>
    %c0_3 = arith.constant 0 : index
    %c0_4 = arith.constant 0 : index
    %4 = vector.load %arg3[%c0_3, %c0_4] : memref<1x256xf32, #tpu.memory_space<vmem>>, vector<1x256xf32>
    %5 = vector.broadcast %4 : vector<1x256xf32> to vector<16x256xf32>
    %6 = arith.addf %3, %5 : vector<16x256xf32>
    %c0_5 = arith.constant 0 : index
    %c0_6 = arith.constant 0 : index
    %7 = vector.load %arg4[%c0_5, %c0_6] : memref<16x256xf32, #tpu.memory_space<vmem>>, vector<16x256xf32>
    tpu.vector_store %arg4[%c0_5, %c0_6], %6 {strides = array<i32>} : memref<16x256xf32, #tpu.memory_space<vmem>>, vector<16x256xf32>,
    return
  }
  func.func @transform_0(%arg0: i32) -> (i32, i32) {
    %c0_i32 = arith.constant 0 : i32
    %c0_i32_0 = arith.constant 0 : i32
    return %arg0, %c0_i32 : i32, i32
  }
  func.func @transform_1(%arg0: i32) -> (i32, i32) {
    %c0_i32 = arith.constant 0 : i32
    %c0_i32_0 = arith.constant 0 : i32
    %c0_i32_1 = arith.constant 0 : i32
    return %c0_i32, %c0_i32_0 : i32, i32
  }
  func.func @transform_2(%arg0: i32) -> (i32, i32) {
    %c0_i32 = arith.constant 0 : i32
    %c0_i32_0 = arith.constant 0 : i32
    %c0_i32_1 = arith.constant 0 : i32
    return %c0_i32, %c0_i32_0 : i32, i32
  }
  func.func @transform_3(%arg0: i32) -> (i32, i32) {
    %c0_i32 = arith.constant 0 : i32
    %c0_i32_0 = arith.constant 0 : i32
    return %arg0, %c0_i32 : i32, i32
  }
}

</mosaic_0001>

<llo_original>
// kernel: tpu_custom_call.1
$region0: #{tpu_custom_call.1}
  #allocation0 [shape = 'u32[]', space=smem, size = 0x4, offset = 0x4, fixed_abs, tag = 'smem constant byte address 0x4 - core index']
  #allocation1 [shape = 'u32[72,128]{1,0:T(1,128)}', space=vmem, size = 0x9000, scoped, tag = 'internal scratch']
  %s0 = inlined_call_operand.hbm [shape: f32[16,32], index: 0, kind: input, shape index: {}]
  %s1 = inlined_call_operand.hbm [shape: bf16[32,256], index: 1, kind: input, shape index: {}]
  %s2 = inlined_call_operand.hbm [shape: f32[1,256], index: 2, kind: input, shape index: {}]
  %s3 = inlined_call_operand.hbm [shape: f32[16,256], index: 3, kind: output, shape index: {}]
  %s4 = sld [smem:[#allocation0]]
  $region34: #{tpu_custom_call.1} parent=0
    _
  %s6 = ssub.s32 1, %s4
  %s7 = scalar_select 0, %s6, %s4
  $region1: #{tpu_custom_call.1} parent=0
    #allocation2 [shape = 'u8[8192]{0}', space=vmem, size = 0x2000, scoped, tag = 'input window, operand 0, single buffered']
    #allocation3 [shape = 's32[1]{0}', space=sflag, size = 0x4, scoped, tag = 'scoped memory for tpu_custom_call.1']
    #allocation4 [shape = 's32[1]{0}', space=sflag, size = 0x4, scoped, tag = 'scoped memory for tpu_custom_call.1']
    #allocation5 [shape = 'u8[16384]{0}', space=vmem, size = 0x4000, scoped, tag = 'input window, operand 1, single buffered']
    #allocation6 [shape = 's32[1]{0}', space=sflag, size = 0x4, scoped, tag = 'scoped memory for tpu_custom_call.1']
    #allocation7 [shape = 'u8[1024]{0}', space=vmem, size = 0x400, scoped, tag = 'input window, operand 2, single buffered']
    #allocation8 [shape = 'u8[16384]{0}', space=vmem, size = 0x4000, scoped, tag = 'output window, operand 0, single buffered']
    %8 = vsyncpa [#allocation3], 0
    %9 = vsyncpa [#allocation6], 0
    %10 = vsyncpa [#allocation4], 0
    // Predicated region
    $region2: #{tpu_custom_call.1} parent=1 // pred_check
      _
    $region3: #{tpu_custom_call.1} parent=1 // pred_check_branch
      %12 = sbr.rel (0) target = $region5
    $region4: #{tpu_custom_call.1} parent=1 // pred_region
      %14 = vsyncadd [#allocation3], 0
      %s15 = sshll.u32 %s0, 4
      %s16 = int_to_ptr.hbm [resolvable:$true] %s15
      %s17 = sshll.u32 [#allocation2], 4
      %s18 = int_to_ptr.vmem [resolvable:$true] %s17
      %23 = dma.hbm_to_vmem [thread:$0]  %s16, 256, %s18, [#allocation3], 128, 128, 8
    $region5: #{tpu_custom_call.1} parent=1 // pred_fallthru
      _
    // Predicated region
    $region6: #{tpu_custom_call.1} parent=1 // pred_check
      _
    $region7: #{tpu_custom_call.1} parent=1 // pred_check_branch
      %25 = sbr.rel (0) target = $region9
    $region8: #{tpu_custom_call.1} parent=1 // pred_region
      %27 = vsyncadd [#allocation6], 0
      %s28 = sshll.u32 %s1, 4
      %s29 = int_to_ptr.hbm [resolvable:$true] %s28
      %s30 = sshll.u32 [#allocation5], 4
      %s31 = int_to_ptr.vmem [resolvable:$true] %s30
      %36 = dma.hbm_to_vmem [thread:$0]  %s29, 512, %s31, [#allocation6], 128, 128, 8
    $region9: #{tpu_custom_call.1} parent=1 // pred_fallthru
      _
    // Predicated region
    $region10: #{tpu_custom_call.1} parent=1 // pred_check
      _
    $region11: #{tpu_custom_call.1} parent=1 // pred_check_branch
      %38 = sbr.rel (0) target = $region13
    $region12: #{tpu_custom_call.1} parent=1 // pred_region
      %40 = vsyncadd [#allocation6], 0
      %s42 = sshll.u32 %s2, 4
      %s43 = int_to_ptr.hbm [resolvable:$true] %s42
      %s44 = sshll.u32 [#allocation7], 4
      %s45 = int_to_ptr.vmem [resolvable:$true] %s44
      %47 = dma.hbm_to_vmem [thread:$0]  %s43, 32, %s45, [#allocation6]
    $region13: #{tpu_custom_call.1} parent=1 // pred_fallthru
      _
    // Predicated region
    $region14: #{tpu_custom_call.1} parent=1 // pred_check
      _
    $region15: #{tpu_custom_call.1} parent=1 // pred_check_branch
      %49 = sbr.rel (0) target = $region17
    $region16: #{tpu_custom_call.1} parent=1 // pred_region
      %51 = dma.done [#allocation3], 256
    $region17: #{tpu_custom_call.1} parent=1 // pred_fallthru
      _
    // Predicated region
    $region18: #{tpu_custom_call.1} parent=1 // pred_check
      _
    $region19: #{tpu_custom_call.1} parent=1 // pred_check_branch
      %53 = sbr.rel (0) target = $region21
    $region20: #{tpu_custom_call.1} parent=1 // pred_region
      %55 = dma.done [#allocation6], 512
    $region21: #{tpu_custom_call.1} parent=1 // pred_fallthru
      _
    // Predicated region
    $region22: #{tpu_custom_call.1} parent=1 // pred_check
      _
    $region23: #{tpu_custom_call.1} parent=1 // pred_check_branch
      %57 = sbr.rel (0) target = $region25
    $region24: #{tpu_custom_call.1} parent=1 // pred_region
      %59 = dma.done [#allocation6], 32
    $region25: #{tpu_custom_call.1} parent=1 // pred_fallthru
      _
    %v61 = vld [vmem:[#allocation2] sm:$0xff]
    %v62 = vld [vmem:[#allocation2 + $0x8] sm:$0xff]
    %v63 = vpack.c.bf16 %v62, %v61
    %v64 = vld [vmem:[#allocation5] sm:$0xff]
    %v65 = vld [vmem:[#allocation5 + $0x8] sm:$0xff]
    %v66 = vld [vmem:[#allocation5 + $0x10] sm:$0xff]
    %v67 = vld [vmem:[#allocation5 + $0x18] sm:$0xff]
    %v68 = vld [vmem:[#allocation7] sm:$0x3]
    %v70 = vperm.slane %v68, 0
    %v71 = vperm.slane %v68, 1
    %v78 = vunpack.c.l.b16 %v64
    %v79 = vunpack.c.h.b16 %v64
    %v80 = vunpack.c.l.b16 %v65
    %v81 = vunpack.c.h.b16 %v65
    %v82 = vunpack.c.l.b16 %v66
    %v83 = vunpack.c.h.b16 %v66
    %v84 = vunpack.c.l.b16 %v67
    %v85 = vunpack.c.h.b16 %v67
    %v86 = vpack.c.b16 %v80, %v78
    %v87 = vpack.c.b16 %v81, %v79
    %v88 = vpack.c.b16 %v84, %v82
    %v89 = vpack.c.b16 %v85, %v83
    %vm94 = vcmask 261120
    %v96 = vsel %vm94, %v63, 0
    %98 = vmatpush.bf16.msra.mxu0 0
    %99 = vmatpush.bf16.msra.mxu0 0
    %100 = vmatpush.bf16.msra.mxu0 0
    %101 = vmatpush.bf16.msra.mxu0 0
    %102 = vmatpush.bf16.msra.mxu0 0
    %103 = vmatpush.bf16.msra.mxu0 0
    %104 = vmatpush.bf16.msra.mxu0 %v88
    %105 = vmatpush.bf16.msra.mxu0 %v86
    %106 = vmatmul.bf16.gmra.mxu0 %v96
    %v107 = vpop.f32.mrf.mxu0
    %v108 = vadd.f32 %v70, %v107
    %v109 = vpop.f32.mrf.mxu0
    %v110 = vadd.f32 %v70, %v109
    %111 = vdwg.mxu0
    %112 = vmatpush.bf16.msra.mxu0 0
    %113 = vmatpush.bf16.msra.mxu0 0
    %114 = vmatpush.bf16.msra.mxu0 0
    %115 = vmatpush.bf16.msra.mxu0 0
    %116 = vmatpush.bf16.msra.mxu0 0
    %117 = vmatpush.bf16.msra.mxu0 0
    %118 = vmatpush.bf16.msra.mxu0 %v89
    %119 = vmatpush.bf16.msra.mxu0 %v87
    %120 = vmatmul.bf16.gmra.mxu0 %v96
    %v121 = vpop.f32.mrf.mxu0
    %v122 = vadd.f32 %v71, %v121
    %v123 = vpop.f32.mrf.mxu0
    %v124 = vadd.f32 %v71, %v123
    %125 = vdwg.mxu0
    %126 = vst [vmem:[#allocation8] sm:$0xff] %v108
    %127 = vst [vmem:[#allocation8 + $0x8] sm:$0xff] %v122
    %128 = vst [vmem:[#allocation8 + $0x10] sm:$0xff] %v110
    %129 = vst [vmem:[#allocation8 + $0x18] sm:$0xff] %v124
    // Predicated region
    $region26: #{tpu_custom_call.1} parent=1 // pred_check
      _
    $region27: #{tpu_custom_call.1} parent=1 // pred_check_branch
      %131 = sbr.rel (0) target = $region29
    $region28: #{tpu_custom_call.1} parent=1 // pred_region
      %133 = vsyncadd [#allocation4], 0
      %s134 = sshll.u32 [#allocation8], 4
      %s135 = int_to_ptr.vmem [resolvable:$true] %s134
      %s136 = sshll.u32 %s3, 4
      %s137 = int_to_ptr.hbm [resolvable:$true] %s136
      %142 = dma.vmem_to_hbm [thread:$0]  %s135, 512, %s137, [#allocation4], 256, 256, 16
    $region29: #{tpu_custom_call.1} parent=1 // pred_fallthru
      _
    // Predicated region
    $region30: #{tpu_custom_call.1} parent=1 // pred_check
      _
    $region31: #{tpu_custom_call.1} parent=1 // pred_check_branch
      %144 = sbr.rel (0) target = $region33
    $region32: #{tpu_custom_call.1} parent=1 // pred_region
      %146 = dma.done [#allocation4], 512
    $region33: #{tpu_custom_call.1} parent=1 // pred_fallthru
      _
    %147 = vsyncpa [#allocation3], 1
    %148 = vsyncpa [#allocation6], 1
    %149 = vsyncpa [#allocation4], 1

</llo_original>
